<compile_context>
chip_gen: v5e
topology: v5e:2x2
jax: 0.10.0
libtpu: 0.0.40
codegen_flags: <defaults>
</compile_context>

<pallas_src>
import jax
import jax.numpy as jnp
from jax.experimental import pallas as pl
from jax.experimental.pallas import tpu as pltpu

BN_EPS = 1e-5


# ----------------------------- Pallas kernel ------------------------------- #

def _make_msg_mlp_kernel(K, num_layers, compute_dtype):
    """Kernel: [K, Cin, TS] grouped slab -> per-k MLP chain -> running max over K."""

    def kernel(x_ref, *refs):
        o_ref = refs[-1]
        p = refs[:-1]
        # Hoist the tiny folded weights / shifts out of the K loop (no per-iter reload).
        ws = [p[2 * j][...] for j in range(num_layers)]        # (Cout_j, Cin_j), compute_dtype
        shs = [p[2 * j + 1][...] for j in range(num_layers)]   # (Cout_j, 1), f32

        acc = None
        # TODO(synk): for very large K (>~64) this static unroll should become a K grid
        # axis marked "arbitrary" with a VMEM max-accumulator; K here is small (8/16).
        for k in range(K):
            h = x_ref[0, k]                                    # (Cin, TS)  lanes = centroids
            y = None
            for j in range(num_layers):
                y = jnp.dot(ws[j], h, preferred_element_type=jnp.float32)   # MXU, f32 acc
                y = jnp.maximum(y + shs[j], 0.0)               # folded-BN shift + ReLU (f32)
                h = y.astype(compute_dtype)                    # feed next layer (no-op if f32)
            acc = y if acc is None else jnp.maximum(acc, y)    # running max over neighbors
        o_ref[0] = acc.astype(o_ref.dtype)                     # (Cout, TS) lane-dense store

    return kernel


def _pick_tile_s(S, K, cin, cout_max, itemsize):
    """Largest S-tile (multiple of 128 that divides S) fitting a conservative VMEM budget."""
    if S % 128 != 0:
        return S          # small problems: single full-S block (lane dim == full array dim)
    budget = 12 * 1024 * 1024   # per-step footprint budget; leaves 2x-buffer headroom on v7x
    best = 128
    ts = 128
    while ts <= S:
        if S % ts == 0:
            # 2x-buffered input tile + 2x output tile + f32 working intermediates
            fp = ts * (2 * K * cin * itemsize + 2 * cout_max * 4 + 3 * cout_max * 4)
            if fp <= budget:
                best = ts
        ts += 128
    return best


def msg_mlp_maxpool(g_cf, ws, shs, compute_dtype=jnp.float32):
    """g_cf: (B, K, Cin, S) channel-first grouped features -> (B, Cout_last, S)."""
    B, K, Cin, S = g_cf.shape
    num_layers = len(ws)
    Cout = ws[-1].shape[0]
    cmax = max(w.shape[0] for w in ws)

    g_cf = g_cf.astype(compute_dtype)
    ws = [w.astype(compute_dtype) for w in ws]
    shs = [s.astype(jnp.float32) for s in shs]

    TS = _pick_tile_s(S, K, Cin, cmax, jnp.dtype(compute_dtype).itemsize)
    kernel = _make_msg_mlp_kernel(K, num_layers, compute_dtype)

    in_specs = [pl.BlockSpec((1, K, Cin, TS), lambda b, ts: (b, 0, 0, ts))]
    args = [g_cf]
    for w, sh in zip(ws, shs):
        in_specs.append(pl.BlockSpec(w.shape, lambda b, ts: (0, 0)))
        in_specs.append(pl.BlockSpec(sh.shape, lambda b, ts: (0, 0)))
        args += [w, sh]

    flops = 2 * B * S * K * sum(int(w.shape[0]) * int(w.shape[1]) for w in ws)
    bytes_accessed = int(
        g_cf.size * g_cf.dtype.itemsize
        + sum(int(w.size) * w.dtype.itemsize for w in ws)
        + sum(int(s.size) * 4 for s in shs)
        + B * Cout * S * 4
    )

    return pl.pallas_call(
        kernel,
        out_shape=jax.ShapeDtypeStruct((B, Cout, S), jnp.float32),
        grid=(B, S // TS),
        in_specs=in_specs,
        out_specs=pl.BlockSpec((1, Cout, TS), lambda b, ts: (b, 0, ts)),
        compiler_params=pltpu.CompilerParams(
            dimension_semantics=("parallel", "parallel"),
            vmem_limit_bytes=48 * 1024 * 1024,
        ),
        cost_estimate=pl.CostEstimate(
            flops=flops, transcendentals=0, bytes_accessed=bytes_accessed),
    )(*args)


# ------------------------------ glue (plain JAX) ---------------------------- #

def _fold_bn(layer, eps=BN_EPS):
    """Fold Conv2d bias + eval-mode BatchNorm2d into the weight and a per-channel shift."""
    a = layer["gamma"] / jnp.sqrt(layer["var"] + eps)                 # (Cout,)
    w_folded = layer["w"] * a[:, None]                                # (Cout, Cin), scale folded
    shift = ((layer["b"] - layer["mean"]) * a + layer["beta"])[:, None]   # (Cout, 1)
    return w_folded.astype(jnp.float32), shift.astype(jnp.float32)


def _knn_indices(new_xyz_t, xyz_t, K):
    """k-nearest-neighbor indices via the MXU identity ||a-b||^2 = ||a||^2+||b||^2-2a.b."""
    a2 = jnp.sum(new_xyz_t * new_xyz_t, axis=-1)[:, :, None]          # (B, S, 1)
    b2 = jnp.sum(xyz_t * xyz_t, axis=-1)[:, None, :]                  # (B, 1, N)
    ab = jnp.einsum("bsc,bnc->bsn", new_xyz_t, xyz_t)                 # (B, S, N) on the MXU
    d2 = a2 + b2 - 2.0 * ab
    # TODO(synk): top-k neighbor selection (torch.topk) has no clean Pallas equivalent; XLA.
    _, idx = jax.lax.top_k(-d2, K)
    return idx                                                        # (B, S, K)


def _gather_neighbors(feat_bnc, idx_bsk):
    # feat: (B, N, F), idx: (B, S, K) -> (B, S, K, F)
    # TODO(synk): gather stays in XLA; fusing it into the kernel via scalar-prefetch DMA
    # would remove an HBM round trip of the grouped tensor.
    return jax.vmap(lambda f, ii: f[ii])(feat_bnc, idx_bsk)


def pointnet_sa_msg_pallas(xyz, points, params, npoint, nsample_list,
                           compute_dtype=jnp.float32):
    """xyz: [B, 3, N], points: [B, D, N] -> (new_xyz [B,3,S], new_points [B,sum(Cout),S])."""
    S = npoint
    xyz_t = jnp.transpose(xyz, (0, 2, 1))            # (B, N, 3)
    pts_t = jnp.transpose(points, (0, 2, 1))         # (B, N, D)
    new_xyz_t = xyz_t[:, :S, :]                      # (B, S, 3)   (fps_idx == arange(S))

    outs = []
    for i, K in enumerate(nsample_list):
        idx = _knn_indices(new_xyz_t, xyz_t, K)                               # (B, S, K)
        gxyz = _gather_neighbors(xyz_t, idx) - new_xyz_t[:, :, None, :]       # (B, S, K, 3)
        gpts = _gather_neighbors(pts_t, idx)                                  # (B, S, K, D)
        grouped = jnp.concatenate([gpts, gxyz], axis=-1)                      # (B, S, K, Cin)
        g_cf = jnp.transpose(grouped, (0, 2, 3, 1))                           # (B, K, Cin, S)

        ws, shs = [], []
        for layer in params[i]:
            wf, sh = _fold_bn(layer)
            ws.append(wf)
            shs.append(sh)

        outs.append(msg_mlp_maxpool(g_cf, ws, shs, compute_dtype))            # (B, Cout_i, S)

    new_points = jnp.concatenate(outs, axis=1)       # (B, sum(Cout), S) — already NCW
    new_xyz = xyz[:, :, :S]                          # (B, 3, S) directly from NCW input
    return new_xyz, new_points


# ------------------------- reference (pure jnp, unfused math) ---------------- #

def reference_forward(xyz, points, params, npoint, nsample_list, eps=BN_EPS):
    xyz_t = jnp.transpose(xyz, (0, 2, 1))
    pts_t = jnp.transpose(points, (0, 2, 1))
    S = npoint
    new_xyz_t = xyz_t[:, :S, :]
    outs = []
    for i, K in enumerate(nsample_list):
        idx = _knn_indices(new_xyz_t, xyz_t, K)
        gxyz = _gather_neighbors(xyz_t, idx) - new_xyz_t[:, :, None, :]
        gpts = _gather_neighbors(pts_t, idx)
        h = jnp.concatenate([gpts, gxyz], axis=-1)                            # (B, S, K, Cin)
        for layer in params[i]:
            y = jnp.einsum("bskc,oc->bsko", h, layer["w"]) + layer["b"]
            y = (y - layer["mean"]) / jnp.sqrt(layer["var"] + eps) * layer["gamma"] + layer["beta"]
            h = jnp.maximum(y, 0.0)
        outs.append(jnp.max(h, axis=2))                                       # (B, S, Cout)
    new_points = jnp.concatenate(outs, axis=-1)
    return jnp.transpose(new_xyz_t, (0, 2, 1)), jnp.transpose(new_points, (0, 2, 1))


# --------------------------- deterministic parameters ----------------------- #

def init_params(key, in_channel, mlp_list):
    params = []
    for mlp in mlp_list:
        layers = []
        last = in_channel
        for out_ch in mlp:
            key, k1, k2, k3, k4, k5, k6 = jax.random.split(key, 7)
            layers.append(dict(
                w=jax.random.normal(k1, (out_ch, last), jnp.float32) / jnp.sqrt(last),
                b=0.1 * jax.random.normal(k2, (out_ch,), jnp.float32),
                gamma=1.0 + 0.1 * jax.random.normal(k3, (out_ch,), jnp.float32),
                beta=0.1 * jax.random.normal(k4, (out_ch,), jnp.float32),
                mean=0.1 * jax.random.normal(k5, (out_ch,), jnp.float32),
                var=0.5 + jax.random.uniform(k6, (out_ch,), jnp.float32),
            ))
            last = out_ch
        params.append(layers)
    return params


if __name__ == "__main__":
    key = jax.random.PRNGKey(0)
    B, C, N, D = 2, 3, 32, 4
    npoint = 8
    radius_list = [0.2, 0.4]       # unused by this module's forward (kNN, not ball query)
    nsample_list = [8, 16]
    in_channel = D + C             # conv input = concat(points, centered xyz)
    mlp_list = [[16, 32], [16, 32]]

    k1, k2, k3 = jax.random.split(key, 3)
    xyz = jax.random.normal(k1, (B, C, N), jnp.float32)
    points = jax.random.normal(k2, (B, D, N), jnp.float32)
    params = init_params(k3, in_channel, mlp_list)

    new_xyz, new_points = pointnet_sa_msg_pallas(xyz, points, params, npoint, nsample_list)
    jax.block_until_ready((new_xyz, new_points))

    ref_xyz, ref_points = reference_forward(xyz, points, params, npoint, nsample_list)
    assert new_xyz.shape == (B, C, npoint)
    assert new_points.shape == (B, sum(m[-1] for m in mlp_list), npoint)
    assert jnp.allclose(new_xyz, ref_xyz, atol=1e-5)
    assert jnp.allclose(new_points, ref_points, atol=1e-4, rtol=1e-4)
    print("KERNEL_OK")
</pallas_src>

<mosaic_0001>
module attributes {stable_mosaic.version = 11 : i64} {
  func.func @kernel(%arg0: i32, %arg1: i32, %arg2: memref<1x8x7x8xf32, #tpu.memory_space<vmem>>, %arg3: memref<16x7xf32, #tpu.memory_space<vmem>>, %arg4: memref<16x1xf32, #tpu.memory_space<vmem>>, %arg5: memref<32x16xf32, #tpu.memory_space<vmem>>, %arg6: memref<32x1xf32, #tpu.memory_space<vmem>>, %arg7: memref<1x32x8xf32, #tpu.memory_space<vmem>>) attributes {dimension_semantics = [#tpu.dimension_semantics<parallel>, #tpu.dimension_semantics<parallel>], iteration_bounds = array<i64: 2, 1>, scalar_prefetch = 0 : i64, scratch_operands = 0 : i64, tpu.core_type = #tpu.core_type<tc>, window_params = [{transform_indices = @transform_0, window_bounds = array<i64: 1, 8, 7, 8>}, {pipeline_mode = #tpu.pipeline_mode<synchronous>, transform_indices = @transform_1, window_bounds = array<i64: 16, 7>}, {pipeline_mode = #tpu.pipeline_mode<synchronous>, transform_indices = @transform_2, window_bounds = array<i64: 16, 1>}, {pipeline_mode = #tpu.pipeline_mode<synchronous>, transform_indices = @transform_3, window_bounds = array<i64: 32, 16>}, {pipeline_mode = #tpu.pipeline_mode<synchronous>, transform_indices = @transform_4, window_bounds = array<i64: 32, 1>}, {transform_indices = @transform_5, window_bounds = array<i64: 1, 32, 8>}]} {
    %c0 = arith.constant 0 : index
    %c0_0 = arith.constant 0 : index
    %0 = vector.load %arg3[%c0, %c0_0] : memref<16x7xf32, #tpu.memory_space<vmem>>, vector<16x7xf32>
    %c0_1 = arith.constant 0 : index
    %c0_2 = arith.constant 0 : index
    %1 = vector.load %arg5[%c0_1, %c0_2] : memref<32x16xf32, #tpu.memory_space<vmem>>, vector<32x16xf32>
    %c0_3 = arith.constant 0 : index
    %c0_4 = arith.constant 0 : index
    %2 = vector.load %arg4[%c0_3, %c0_4] : memref<16x1xf32, #tpu.memory_space<vmem>>, vector<16x1xf32>
    %c0_5 = arith.constant 0 : index
    %c0_6 = arith.constant 0 : index
    %3 = vector.load %arg6[%c0_5, %c0_6] : memref<32x1xf32, #tpu.memory_space<vmem>>, vector<32x1xf32>
    %c0_7 = arith.constant 0 : index
    %c0_8 = arith.constant 0 : index
    %c0_9 = arith.constant 0 : index
    %c0_10 = arith.constant 0 : index
    %4 = vector.load %arg2[%c0_7, %c0_8, %c0_9, %c0_10] : memref<1x8x7x8xf32, #tpu.memory_space<vmem>>, vector<1x1x7x8xf32>
    %5 = vector.shape_cast %4 : vector<1x1x7x8xf32> to vector<7x8xf32>
    %cst = arith.constant dense<0.000000e+00> : vector<16x8xf32>
    %6 = tpu.matmul %0, %5, %cst {dimension_numbers = #tpu.dot_dimension_numbers<[1], [0], [0], [1], [0, 0, 1, 1], [], []>} : vector<16x7xf32>, vector<7x8xf32>, vector<16x8xf32> -> vector<16x8xf32>
    %7 = vector.broadcast %2 : vector<16x1xf32> to vector<16x8xf32>
    %8 = arith.addf %6, %7 : vector<16x8xf32>
    %cst_11 = arith.constant 0.000000e+00 : f32
    %9 = vector.broadcast %cst_11 : f32 to vector<16x8xf32>
    %10 = arith.maximumf %8, %9 : vector<16x8xf32>
    %cst_12 = arith.constant dense<0.000000e+00> : vector<32x8xf32>
    %11 = tpu.matmul %1, %10, %cst_12 {dimension_numbers = #tpu.dot_dimension_numbers<[1], [0], [0], [1], [0, 0, 1, 1], [], []>} : vector<32x16xf32>, vector<16x8xf32>, vector<32x8xf32> -> vector<32x8xf32>
    %12 = vector.broadcast %3 : vector<32x1xf32> to vector<32x8xf32>
    %13 = arith.addf %11, %12 : vector<32x8xf32>
    %cst_13 = arith.constant 0.000000e+00 : f32
    %14 = vector.broadcast %cst_13 : f32 to vector<32x8xf32>
    %15 = arith.maximumf %13, %14 : vector<32x8xf32>
    %c0_14 = arith.constant 0 : index
    %c1 = arith.constant 1 : index
    %c0_15 = arith.constant 0 : index
    %c0_16 = arith.constant 0 : index
    %16 = vector.load %arg2[%c0_14, %c1, %c0_15, %c0_16] : memref<1x8x7x8xf32, #tpu.memory_space<vmem>>, vector<1x1x7x8xf32>
    %17 = vector.shape_cast %16 : vector<1x1x7x8xf32> to vector<7x8xf32>
    %cst_17 = arith.constant dense<0.000000e+00> : vector<16x8xf32>
    %18 = tpu.matmul %0, %17, %cst_17 {dimension_numbers = #tpu.dot_dimension_numbers<[1], [0], [0], [1], [0, 0, 1, 1], [], []>} : vector<16x7xf32>, vector<7x8xf32>, vector<16x8xf32> -> vector<16x8xf32>
    %19 = vector.broadcast %2 : vector<16x1xf32> to vector<16x8xf32>
    %20 = arith.addf %18, %19 : vector<16x8xf32>
    %cst_18 = arith.constant 0.000000e+00 : f32
    %21 = vector.broadcast %cst_18 : f32 to vector<16x8xf32>
    %22 = arith.maximumf %20, %21 : vector<16x8xf32>
    %cst_19 = arith.constant dense<0.000000e+00> : vector<32x8xf32>
    %23 = tpu.matmul %1, %22, %cst_19 {dimension_numbers = #tpu.dot_dimension_numbers<[1], [0], [0], [1], [0, 0, 1, 1], [], []>} : vector<32x16xf32>, vector<16x8xf32>, vector<32x8xf32> -> vector<32x8xf32>
    %24 = vector.broadcast %3 : vector<32x1xf32> to vector<32x8xf32>
    %25 = arith.addf %23, %24 : vector<32x8xf32>
    %cst_20 = arith.constant 0.000000e+00 : f32
    %26 = vector.broadcast %cst_20 : f32 to vector<32x8xf32>
    %27 = arith.maximumf %25, %26 : vector<32x8xf32>
    %28 = arith.maximumf %15, %27 : vector<32x8xf32>
    %c0_21 = arith.constant 0 : index
    %c2 = arith.constant 2 : index
    %c0_22 = arith.constant 0 : index
    %c0_23 = arith.constant 0 : index
    %29 = vector.load %arg2[%c0_21, %c2, %c0_22, %c0_23] : memref<1x8x7x8xf32, #tpu.memory_space<vmem>>, vector<1x1x7x8xf32>
    %30 = vector.shape_cast %29 : vector<1x1x7x8xf32> to vector<7x8xf32>
    %cst_24 = arith.constant dense<0.000000e+00> : vector<16x8xf32>
    %31 = tpu.matmul %0, %30, %cst_24 {dimension_numbers = #tpu.dot_dimension_numbers<[1], [0], [0], [1], [0, 0, 1, 1], [], []>} : vector<16x7xf32>, vector<7x8xf32>, vector<16x8xf32> -> vector<16x8xf32>
    %32 = vector.broadcast %2 : vector<16x1xf32> to vector<16x8xf32>
    %33 = arith.addf %31, %32 : vector<16x8xf32>
    %cst_25 = arith.constant 0.000000e+00 : f32
    %34 = vector.broadcast %cst_25 : f32 to vector<16x8xf32>
    %35 = arith.maximumf %33, %34 : vector<16x8xf32>
    %cst_26 = arith.constant dense<0.000000e+00> : vector<32x8xf32>
    %36 = tpu.matmul %1, %35, %cst_26 {dimension_numbers = #tpu.dot_dimension_numbers<[1], [0], [0], [1], [0, 0, 1, 1], [], []>} : vector<32x16xf32>, vector<16x8xf32>, vector<32x8xf32> -> vector<32x8xf32>
    %37 = vector.broadcast %3 : vector<32x1xf32> to vector<32x8xf32>
    %38 = arith.addf %36, %37 : vector<32x8xf32>
    %cst_27 = arith.constant 0.000000e+00 : f32
    %39 = vector.broadcast %cst_27 : f32 to vector<32x8xf32>
    %40 = arith.maximumf %38, %39 : vector<32x8xf32>
    %41 = arith.maximumf %28, %40 : vector<32x8xf32>
    %c0_28 = arith.constant 0 : index
    %c3 = arith.constant 3 : index
    %c0_29 = arith.constant 0 : index
    %c0_30 = arith.constant 0 : index
    %42 = vector.load %arg2[%c0_28, %c3, %c0_29, %c0_30] : memref<1x8x7x8xf32, #tpu.memory_space<vmem>>, vector<1x1x7x8xf32>
    %43 = vector.shape_cast %42 : vector<1x1x7x8xf32> to vector<7x8xf32>
    %cst_31 = arith.constant dense<0.000000e+00> : vector<16x8xf32>
    %44 = tpu.matmul %0, %43, %cst_31 {dimension_numbers = #tpu.dot_dimension_numbers<[1], [0], [0], [1], [0, 0, 1, 1], [], []>} : vector<16x7xf32>, vector<7x8xf32>, vector<16x8xf32> -> vector<16x8xf32>
    %45 = vector.broadcast %2 : vector<16x1xf32> to vector<16x8xf32>
    %46 = arith.addf %44, %45 : vector<16x8xf32>
    %cst_32 = arith.constant 0.000000e+00 : f32
    %47 = vector.broadcast %cst_32 : f32 to vector<16x8xf32>
    %48 = arith.maximumf %46, %47 : vector<16x8xf32>
    %cst_33 = arith.constant dense<0.000000e+00> : vector<32x8xf32>
    %49 = tpu.matmul %1, %48, %cst_33 {dimension_numbers = #tpu.dot_dimension_numbers<[1], [0], [0], [1], [0, 0, 1, 1], [], []>} : vector<32x16xf32>, vector<16x8xf32>, vector<32x8xf32> -> vector<32x8xf32>
    %50 = vector.broadcast %3 : vector<32x1xf32> to vector<32x8xf32>
    %51 = arith.addf %49, %50 : vector<32x8xf32>
    %cst_34 = arith.constant 0.000000e+00 : f32
    %52 = vector.broadcast %cst_34 : f32 to vector<32x8xf32>
    %53 = arith.maximumf %51, %52 : vector<32x8xf32>
    %54 = arith.maximumf %41, %53 : vector<32x8xf32>
    %c0_35 = arith.constant 0 : index
    %c4 = arith.constant 4 : index
    %c0_36 = arith.constant 0 : index
    %c0_37 = arith.constant 0 : index
    %55 = vector.load %arg2[%c0_35, %c4, %c0_36, %c0_37] : memref<1x8x7x8xf32, #tpu.memory_space<vmem>>, vector<1x1x7x8xf32>
    %56 = vector.shape_cast %55 : vector<1x1x7x8xf32> to vector<7x8xf32>
    %cst_38 = arith.constant dense<0.000000e+00> : vector<16x8xf32>
    %57 = tpu.matmul %0, %56, %cst_38 {dimension_numbers = #tpu.dot_dimension_numbers<[1], [0], [0], [1], [0, 0, 1, 1], [], []>} : vector<16x7xf32>, vector<7x8xf32>, vector<16x8xf32> -> vector<16x8xf32>
    %58 = vector.broadcast %2 : vector<16x1xf32> to vector<16x8xf32>
    %59 = arith.addf %57, %58 : vector<16x8xf32>
    %cst_39 = arith.constant 0.000000e+00 : f32
    %60 = vector.broadcast %cst_39 : f32 to vector<16x8xf32>
    %61 = arith.maximumf %59, %60 : vector<16x8xf32>
    %cst_40 = arith.constant dense<0.000000e+00> : vector<32x8xf32>
    %62 = tpu.matmul %1, %61, %cst_40 {dimension_numbers = #tpu.dot_dimension_numbers<[1], [0], [0], [1], [0, 0, 1, 1], [], []>} : vector<32x16xf32>, vector<16x8xf32>, vector<32x8xf32> -> vector<32x8xf32>
    %63 = vector.broadcast %3 : vector<32x1xf32> to vector<32x8xf32>
    %64 = arith.addf %62, %63 : vector<32x8xf32>
    %cst_41 = arith.constant 0.000000e+00 : f32
    %65 = vector.broadcast %cst_41 : f32 to vector<32x8xf32>
    %66 = arith.maximumf %64, %65 : vector<32x8xf32>
    %67 = arith.maximumf %54, %66 : vector<32x8xf32>
    %c0_42 = arith.constant 0 : index
    %c5 = arith.constant 5 : index
    %c0_43 = arith.constant 0 : index
    %c0_44 = arith.constant 0 : index
    %68 = vector.load %arg2[%c0_42, %c5, %c0_43, %c0_44] : memref<1x8x7x8xf32, #tpu.memory_space<vmem>>, vector<1x1x7x8xf32>
    %69 = vector.shape_cast %68 : vector<1x1x7x8xf32> to vector<7x8xf32>
    %cst_45 = arith.constant dense<0.000000e+00> : vector<16x8xf32>
    %70 = tpu.matmul %0, %69, %cst_45 {dimension_numbers = #tpu.dot_dimension_numbers<[1], [0], [0], [1], [0, 0, 1, 1], [], []>} : vector<16x7xf32>, vector<7x8xf32>, vector<16x8xf32> -> vector<16x8xf32>
    %71 = vector.broadcast %2 : vector<16x1xf32> to vector<16x8xf32>
    %72 = arith.addf %70, %71 : vector<16x8xf32>
    %cst_46 = arith.constant 0.000000e+00 : f32
    %73 = vector.broadcast %cst_46 : f32 to vector<16x8xf32>
    %74 = arith.maximumf %72, %73 : vector<16x8xf32>
    %cst_47 = arith.constant dense<0.000000e+00> : vector<32x8xf32>
    %75 = tpu.matmul %1, %74, %cst_47 {dimension_numbers = #tpu.dot_dimension_numbers<[1], [0], [0], [1], [0, 0, 1, 1], [], []>} : vector<32x16xf32>, vector<16x8xf32>, vector<32x8xf32> -> vector<32x8xf32>
    %76 = vector.broadcast %3 : vector<32x1xf32> to vector<32x8xf32>
    %77 = arith.addf %75, %76 : vector<32x8xf32>
    %cst_48 = arith.constant 0.000000e+00 : f32
    %78 = vector.broadcast %cst_48 : f32 to vector<32x8xf32>
    %79 = arith.maximumf %77, %78 : vector<32x8xf32>
    %80 = arith.maximumf %67, %79 : vector<32x8xf32>
    %c0_49 = arith.constant 0 : index
    %c6 = arith.constant 6 : index
    %c0_50 = arith.constant 0 : index
    %c0_51 = arith.constant 0 : index
    %81 = vector.load %arg2[%c0_49, %c6, %c0_50, %c0_51] : memref<1x8x7x8xf32, #tpu.memory_space<vmem>>, vector<1x1x7x8xf32>
    %82 = vector.shape_cast %81 : vector<1x1x7x8xf32> to vector<7x8xf32>
    %cst_52 = arith.constant dense<0.000000e+00> : vector<16x8xf32>
    %83 = tpu.matmul %0, %82, %cst_52 {dimension_numbers = #tpu.dot_dimension_numbers<[1], [0], [0], [1], [0, 0, 1, 1], [], []>} : vector<16x7xf32>, vector<7x8xf32>, vector<16x8xf32> -> vector<16x8xf32>
    %84 = vector.broadcast %2 : vector<16x1xf32> to vector<16x8xf32>
    %85 = arith.addf %83, %84 : vector<16x8xf32>
    %cst_53 = arith.constant 0.000000e+00 : f32
    %86 = vector.broadcast %cst_53 : f32 to vector<16x8xf32>
    %87 = arith.maximumf %85, %86 : vector<16x8xf32>
    %cst_54 = arith.constant dense<0.000000e+00> : vector<32x8xf32>
    %88 = tpu.matmul %1, %87, %cst_54 {dimension_numbers = #tpu.dot_dimension_numbers<[1], [0], [0], [1], [0, 0, 1, 1], [], []>} : vector<32x16xf32>, vector<16x8xf32>, vector<32x8xf32> -> vector<32x8xf32>
    %89 = vector.broadcast %3 : vector<32x1xf32> to vector<32x8xf32>
    %90 = arith.addf %88, %89 : vector<32x8xf32>
    %cst_55 = arith.constant 0.000000e+00 : f32
    %91 = vector.broadcast %cst_55 : f32 to vector<32x8xf32>
    %92 = arith.maximumf %90, %91 : vector<32x8xf32>
    %93 = arith.maximumf %80, %92 : vector<32x8xf32>
    %c0_56 = arith.constant 0 : index
    %c7 = arith.constant 7 : index
    %c0_57 = arith.constant 0 : index
    %c0_58 = arith.constant 0 : index
    %94 = vector.load %arg2[%c0_56, %c7, %c0_57, %c0_58] : memref<1x8x7x8xf32, #tpu.memory_space<vmem>>, vector<1x1x7x8xf32>
    %95 = vector.shape_cast %94 : vector<1x1x7x8xf32> to vector<7x8xf32>
    %cst_59 = arith.constant dense<0.000000e+00> : vector<16x8xf32>
    %96 = tpu.matmul %0, %95, %cst_59 {dimension_numbers = #tpu.dot_dimension_numbers<[1], [0], [0], [1], [0, 0, 1, 1], [], []>} : vector<16x7xf32>, vector<7x8xf32>, vector<16x8xf32> -> vector<16x8xf32>
    %97 = vector.broadcast %2 : vector<16x1xf32> to vector<16x8xf32>
    %98 = arith.addf %96, %97 : vector<16x8xf32>
    %cst_60 = arith.constant 0.000000e+00 : f32
    %99 = vector.broadcast %cst_60 : f32 to vector<16x8xf32>
    %100 = arith.maximumf %98, %99 : vector<16x8xf32>
    %cst_61 = arith.constant dense<0.000000e+00> : vector<32x8xf32>
    %101 = tpu.matmul %1, %100, %cst_61 {dimension_numbers = #tpu.dot_dimension_numbers<[1], [0], [0], [1], [0, 0, 1, 1], [], []>} : vector<32x16xf32>, vector<16x8xf32>, vector<32x8xf32> -> vector<32x8xf32>
    %102 = vector.broadcast %3 : vector<32x1xf32> to vector<32x8xf32>
    %103 = arith.addf %101, %102 : vector<32x8xf32>
    %cst_62 = arith.constant 0.000000e+00 : f32
    %104 = vector.broadcast %cst_62 : f32 to vector<32x8xf32>
    %105 = arith.maximumf %103, %104 : vector<32x8xf32>
    %106 = arith.maximumf %93, %105 : vector<32x8xf32>
    %c0_63 = arith.constant 0 : index
    %c0_64 = arith.constant 0 : index
    %c0_65 = arith.constant 0 : index
    %107 = vector.load %arg7[%c0_63, %c0_64, %c0_65] : memref<1x32x8xf32, #tpu.memory_space<vmem>>, vector<1x32x8xf32>
    %108 = vector.shape_cast %107 : vector<1x32x8xf32> to vector<32x8xf32>
    %109 = vector.shape_cast %106 : vector<32x8xf32> to vector<1x32x8xf32>
    tpu.vector_store %arg7[%c0_63, %c0_64, %c0_65], %109 {strides = array<i32>} : memref<1x32x8xf32, #tpu.memory_space<vmem>>, vector<1x32x8xf32>,
    return
  }
  func.func @transform_0(%arg0: i32, %arg1: i32) -> (i32, i32, i32, i32) {
    %c0_i32 = arith.constant 0 : i32
    %c0_i32_0 = arith.constant 0 : i32
    %c0_i32_1 = arith.constant 0 : i32
    return %arg0, %c0_i32, %c0_i32_0, %arg1 : i32, i32, i32, i32
  }
  func.func @transform_1(%arg0: i32, %arg1: i32) -> (i32, i32) {
    %c0_i32 = arith.constant 0 : i32
    %c0_i32_0 = arith.constant 0 : i32
    %c0_i32_1 = arith.constant 0 : i32
    return %c0_i32, %c0_i32_0 : i32, i32
  }
  func.func @transform_2(%arg0: i32, %arg1: i32) -> (i32, i32) {
    %c0_i32 = arith.constant 0 : i32
    %c0_i32_0 = arith.constant 0 : i32
    %c0_i32_1 = arith.constant 0 : i32
    return %c0_i32, %c0_i32_0 : i32, i32
  }
  func.func @transform_3(%arg0: i32, %arg1: i32) -> (i32, i32) {
    %c0_i32 = arith.constant 0 : i32
    %c0_i32_0 = arith.constant 0 : i32
    %c0_i32_1 = arith.constant 0 : i32
    return %c0_i32, %c0_i32_0 : i32, i32
  }
  func.func @transform_4(%arg0: i32, %arg1: i32) -> (i32, i32) {
    %c0_i32 = arith.constant 0 : i32
    %c0_i32_0 = arith.constant 0 : i32
    %c0_i32_1 = arith.constant 0 : i32
    return %c0_i32, %c0_i32_0 : i32, i32
  }
  func.func @transform_5(%arg0: i32, %arg1: i32) -> (i32, i32, i32) {
    %c0_i32 = arith.constant 0 : i32
    %c0_i32_0 = arith.constant 0 : i32
    return %arg0, %c0_i32, %arg1 : i32, i32, i32
  }
}

</mosaic_0001>

<llo_original>
// kernel: tpu_custom_call.1
$region0: #{tpu_custom_call.1}
  #allocation0 [shape = 'u32[]', space=smem, size = 0x4, offset = 0x4, fixed_abs, tag = 'smem constant byte address 0x4 - core index']
  #allocation1 [shape = 'u32[72,128]{1,0:T(1,128)}', space=vmem, size = 0x9000, scoped, tag = 'internal scratch']
  %s0 = inlined_call_operand.vmem [shape: f32[2,8,7,8], index: 0, kind: input, shape index: {}]
  %s1 = inlined_call_operand.vmem [shape: f32[16,7], index: 1, kind: input, shape index: {}]
  %s2 = inlined_call_operand.vmem [shape: f32[16,1], index: 2, kind: input, shape index: {}]
  %s3 = inlined_call_operand.vmem [shape: f32[32,16], index: 3, kind: input, shape index: {}]
  %s4 = inlined_call_operand.vmem [shape: f32[32,1], index: 4, kind: input, shape index: {}]
  %s5 = inlined_call_operand.vmem [shape: f32[2,32,8], index: 5, kind: output, shape index: {}]
  %s6 = sld [smem:[#allocation0]]
  $region53: #{tpu_custom_call.1} parent=0
    _
  %s8 = ssub.s32 1, %s6
  %s9 = scalar_select 0, %s8, %s6
  loop: start=0, step=1, limit=4
  $region2: #{tpu_custom_call.1} parent=0 // loop_pre_header
    _
  $region3: #{tpu_custom_call.1} parent=0 // loop_header
    %s11 = sphi 0, %s15
    %p12 = scmp.ge.s32.totalorder %s11, 4
    %s18 = sphi 0, %s30
    %s19 = sphi 0, %s26
    %s20 = sphi 0, %s18
    %s21 = sphi 0, %s19
    %s22 = sphi 0, %s20
    %s23 = sphi 0, %s21
    %s35 = sphi 0, %s37
    %s38 = sphi 0, %s35
    %s39 = sphi 0, %s38
    %s55 = sphi 0, %s39
    %s59 = sphi 0, %s59
    %s61 = sphi 0, %s59
    %s62 = sphi 0, %s61
    %s76 = sphi 0, %s62
    %s80 = sphi 0, %s80
    %s82 = sphi 0, %s80
    %s83 = sphi 0, %s82
    %s97 = sphi 0, %s83
    %s101 = sphi 0, %s101
    %s103 = sphi 0, %s101
    %s104 = sphi 0, %s103
    %s118 = sphi 0, %s104
    %s122 = sphi 0, %s122
    %s124 = sphi 0, %s122
    %s125 = sphi 0, %s124
    %s139 = sphi 0, %s125
    %s147 = sphi 0, %s149
    %s150 = sphi 0, %s147
    %s151 = sphi 0, %s150
    %s167 = sphi 0, %s151
  $region4: #{tpu_custom_call.1} parent=0 // loop_header_branch
    %14 = sbr.rel (%p12) target = $region8
  $region5: #{tpu_custom_call.1} parent=0 // loop_body
    %s16 = ssub.s32 %s11, 1
    %s17 = ssub.s32 %s11, 2
    %s24 = sadd.s32 1, %s19
    %p25 = scmp.ge.s32.totalorder %s24, 1
    %s26 = scalar_select %p25, 0, %s24
    %s27 = sadd.s32 1, %s18
    %s28 = scalar_select %p25, %s27, %s18
    %p29 = scmp.ge.s32.totalorder %s28, 2
    %s30 = scalar_select %p29, 0, %s28
    %s31 = ssub.s32 %s18, %s30
    %s32 = ssub.s32 %s19, %s26
    %s33 = sor.u32 %s31, %s32
    %p34 = scmp.eq.s32.totalorder %s33, 0
    %s36 = sadd.s32 %s35, 1
    %s37 = scalar_select %p34, %s35, %s36
    %p40 = pneg %p34
    %p41 = scmp.eq.s32.totalorder %s11, 1
    %p42 = por %p40, %p41
    %p43 = scmp.ne.s32.totalorder %s35, %s38
    %p44 = scmp.eq.s32.totalorder %s11, 0
    %p45 = por %p43, %p44
    %p46 = scmp.ne.s32.totalorder %s35, %s38
    %p47 = scmp.eq.s32.totalorder %s16, 1
    %p48 = por %p46, %p47
    %p49 = scmp.ne.s32.totalorder %s38, %s39
    %p50 = scmp.eq.s32.totalorder %s16, 0
    %p51 = por %p49, %p50
    %p52 = scmp.ne.s32.totalorder %s38, %s39
    %p53 = scmp.eq.s32.totalorder %s17, 1
    %p54 = por %p52, %p53
    %p56 = scmp.ne.s32.totalorder %s39, %s55
    %p57 = scmp.eq.s32.totalorder %s17, 0
    %p58 = por %p56, %p57
    %s60 = sadd.s32 %s59, 1
    %p63 = scmp.eq.s32.totalorder %s11, 1
    %p64 = scmp.ne.s32.totalorder %s59, %s61
    %p65 = scmp.eq.s32.totalorder %s11, 0
    %p66 = por %p64, %p65
    %p67 = scmp.ne.s32.totalorder %s59, %s61
    %p68 = scmp.eq.s32.totalorder %s16, 1
    %p69 = por %p67, %p68
    %p70 = scmp.ne.s32.totalorder %s61, %s62
    %p71 = scmp.eq.s32.totalorder %s16, 0
    %p72 = por %p70, %p71
    %p73 = scmp.ne.s32.totalorder %s61, %s62
    %p74 = scmp.eq.s32.totalorder %s17, 1
    %p75 = por %p73, %p74
    %p77 = scmp.ne.s32.totalorder %s62, %s76
    %p78 = scmp.eq.s32.totalorder %s17, 0
    %p79 = por %p77, %p78
    %s81 = sadd.s32 %s80, 1
    %p84 = scmp.eq.s32.totalorder %s11, 1
    %p85 = scmp.ne.s32.totalorder %s80, %s82
    %p86 = scmp.eq.s32.totalorder %s11, 0
    %p87 = por %p85, %p86
    %p88 = scmp.ne.s32.totalorder %s80, %s82
    %p89 = scmp.eq.s32.totalorder %s16, 1
    %p90 = por %p88, %p89
    %p91 = scmp.ne.s32.totalorder %s82, %s83
    %p92 = scmp.eq.s32.totalorder %s16, 0
    %p93 = por %p91, %p92
    %p94 = scmp.ne.s32.totalorder %s82, %s83
    %p95 = scmp.eq.s32.totalorder %s17, 1
    %p96 = por %p94, %p95
    %p98 = scmp.ne.s32.totalorder %s83, %s97
    %p99 = scmp.eq.s32.totalorder %s17, 0
    %p100 = por %p98, %p99
    %s102 = sadd.s32 %s101, 1
    %p105 = scmp.eq.s32.totalorder %s11, 1
    %p106 = scmp.ne.s32.totalorder %s101, %s103
    %p107 = scmp.eq.s32.totalorder %s11, 0
    %p108 = por %p106, %p107
    %p109 = scmp.ne.s32.totalorder %s101, %s103
    %p110 = scmp.eq.s32.totalorder %s16, 1
    %p111 = por %p109, %p110
    %p112 = scmp.ne.s32.totalorder %s103, %s104
    %p113 = scmp.eq.s32.totalorder %s16, 0
    %p114 = por %p112, %p113
    %p115 = scmp.ne.s32.totalorder %s103, %s104
    %p116 = scmp.eq.s32.totalorder %s17, 1
    %p117 = por %p115, %p116
    %p119 = scmp.ne.s32.totalorder %s104, %s118
    %p120 = scmp.eq.s32.totalorder %s17, 0
    %p121 = por %p119, %p120
    %s123 = sadd.s32 %s122, 1
    %p126 = scmp.eq.s32.totalorder %s11, 1
    %p127 = scmp.ne.s32.totalorder %s122, %s124
    %p128 = scmp.eq.s32.totalorder %s11, 0
    %p129 = por %p127, %p128
    %p130 = scmp.ne.s32.totalorder %s122, %s124
    %p131 = scmp.eq.s32.totalorder %s16, 1
    %p132 = por %p130, %p131
    %p133 = scmp.ne.s32.totalorder %s124, %s125
    %p134 = scmp.eq.s32.totalorder %s16, 0
    %p135 = por %p133, %p134
    %p136 = scmp.ne.s32.totalorder %s124, %s125
    %p137 = scmp.eq.s32.totalorder %s17, 1
    %p138 = por %p136, %p137
    %p140 = scmp.ne.s32.totalorder %s125, %s139
    %p141 = scmp.eq.s32.totalorder %s17, 0
    %p142 = por %p140, %p141
    %s143 = ssub.s32 %s18, %s30
    %s144 = ssub.s32 %s19, %s26
    %s145 = sor.u32 %s143, %s144
    %p146 = scmp.eq.s32.totalorder %s145, 0
    %s148 = sadd.s32 %s147, 1
    %s149 = scalar_select %p146, %s147, %s148
    %p152 = pneg %p146
    %p153 = scmp.eq.s32.totalorder %s11, 1
    %p154 = por %p152, %p153
    %p155 = scmp.ne.s32.totalorder %s147, %s150
    %p156 = scmp.eq.s32.totalorder %s11, 0
    %p157 = por %p155, %p156
    %p158 = scmp.ne.s32.totalorder %s147, %s150
    %p159 = scmp.eq.s32.totalorder %s16, 1
    %p160 = por %p158, %p159
    %p161 = scmp.ne.s32.totalorder %s150, %s151
    %p162 = scmp.eq.s32.totalorder %s16, 0
    %p163 = por %p161, %p162
    %p164 = scmp.ne.s32.totalorder %s150, %s151
    %p165 = scmp.eq.s32.totalorder %s17, 1
    %p166 = por %p164, %p165
    %p168 = scmp.ne.s32.totalorder %s151, %s167
    %p169 = scmp.eq.s32.totalorder %s17, 0
    %p170 = por %p168, %p169
    %p171 = scmp.le.s32.totalorder 1, %s11
    %p172 = scmp.lt.s32.totalorder %s11, 3
    %p173 = pnand %p171, %p172
    %p174 = pneg %p173
    // Predicated region
    $region9: #{tpu_custom_call.1} parent=5 // pred_check
      _
    $region10: #{tpu_custom_call.1} parent=5 // pred_check_branch
      %176 = sbr.rel (%p173) target = $region12
    $region11: #{tpu_custom_call.1} parent=5 // pred_region
      %s177 = ssub.s32 %s11, 1
      // Predicated region
      $region13: #{tpu_custom_call.1} parent=11 // pred_check
        %p178 = pneg %p72
      $region14: #{tpu_custom_call.1} parent=11 // pred_check_branch
        %180 = sbr.rel (%p178) target = $region16
      $region15: #{tpu_custom_call.1} parent=11 // pred_region
        _
      $region16: #{tpu_custom_call.1} parent=11 // pred_fallthru
        _
      // Predicated region
      $region17: #{tpu_custom_call.1} parent=11 // pred_check
        %p181 = pneg %p93
      $region18: #{tpu_custom_call.1} parent=11 // pred_check_branch
        %183 = sbr.rel (%p181) target = $region20
      $region19: #{tpu_custom_call.1} parent=11 // pred_region
        _
      $region20: #{tpu_custom_call.1} parent=11 // pred_fallthru
        _
      // Predicated region
      $region21: #{tpu_custom_call.1} parent=11 // pred_check
        %p184 = pneg %p114
      $region22: #{tpu_custom_call.1} parent=11 // pred_check_branch
        %186 = sbr.rel (%p184) target = $region24
      $region23: #{tpu_custom_call.1} parent=11 // pred_region
        _
      $region24: #{tpu_custom_call.1} parent=11 // pred_fallthru
        _
      // Predicated region
      $region25: #{tpu_custom_call.1} parent=11 // pred_check
        %p187 = pneg %p135
      $region26: #{tpu_custom_call.1} parent=11 // pred_check_branch
        %189 = sbr.rel (%p187) target = $region28
      $region27: #{tpu_custom_call.1} parent=11 // pred_region
        _
      $region28: #{tpu_custom_call.1} parent=11 // pred_fallthru
        _
    $region12: #{tpu_custom_call.1} parent=5 // pred_fallthru
      _
    %p190 = scmp.lt.s32.totalorder %s11, 2
    // Predicated region
    $region29: #{tpu_custom_call.1} parent=5 // pred_check
      %p191 = pneg %p190
    $region30: #{tpu_custom_call.1} parent=5 // pred_check_branch
      %193 = sbr.rel (%p191) target = $region32
    $region31: #{tpu_custom_call.1} parent=5 // pred_region
      // Predicated region
      $region33: #{tpu_custom_call.1} parent=31 // pred_check
        %p194 = pneg %p45
      $region34: #{tpu_custom_call.1} parent=31 // pred_check_branch
        %196 = sbr.rel (%p194) target = $region36
      $region35: #{tpu_custom_call.1} parent=31 // pred_region
        %p197 = scmp.lt.s32.totalorder %s18, 1
        %s198 = scalar_select %p197, %s18, 1
        %p199 = scmp.lt.s32.totalorder %s19, 0
        %s200 = scalar_select %p199, %s19, 0
        %s201 = smul.addr %s198, 8
        %s202 = sadd.s32 %s200, %s201
        %s203 = smul.addr %s202, 8
        %s204 = scalar_lea.vmem %s0, %s203
      $region36: #{tpu_custom_call.1} parent=31 // pred_fallthru
        _
    $region32: #{tpu_custom_call.1} parent=5 // pred_fallthru
      _
    %p205 = scmp.le.s32.totalorder 1, %s11
    %p206 = scmp.lt.s32.totalorder %s11, 3
    %p207 = pnand %p205, %p206
    %p208 = pneg %p207
    // Predicated region
    $region37: #{tpu_custom_call.1} parent=5 // pred_check
      _
    $region38: #{tpu_custom_call.1} parent=5 // pred_check_branch
      %210 = sbr.rel (%p207) target = $region40
    $region39: #{tpu_custom_call.1} parent=5 // pred_region
      %s211 = ssub.s32 %s11, 1
      %p212 = scmp.lt.s32.totalorder %s20, 1
      %s213 = scalar_select %p212, %s20, 1
      %p214 = scmp.lt.s32.totalorder %s21, 0
      %s215 = scalar_select %p214, %s21, 0
      %s216 = smul.addr %s213, 8
      %s217 = sadd.s32 %s215, %s216
      %s218 = smul.addr %s217, 8
      %s219 = scalar_lea.vmem %s0, %s218
      %p220 = pneg %p51
      %p221 = pneg %p48
      %p222 = pneg %p72
      %p223 = pneg %p69
      %p224 = pneg %p93
      %p225 = pneg %p90
      %p226 = pneg %p114
      %p227 = pneg %p111
      %p228 = pneg %p135
      %p229 = pneg %p132
      %p230 = pneg %p163
      %p231 = pneg %p160
      %p232 = scmp.lt.s32.totalorder %s20, 1
      %s233 = scalar_select %p232, %s20, 1
      %p234 = scmp.lt.s32.totalorder %s21, 0
      %s235 = scalar_select %p234, %s21, 0
      %s236 = smul.addr %s233, 4
      %s237 = sadd.s32 %s235, %s236
      %s238 = smul.addr %s237, 8
      %s239 = scalar_lea.vmem %s5, %s238
      %p240 = scmp.lt.s32.totalorder %s20, 1
      %s241 = scalar_select %p240, %s20, 1
      %p242 = scmp.lt.s32.totalorder %s21, 0
      %s243 = scalar_select %p242, %s21, 0
      %s244 = smul.addr %s241, 8
      %s245 = sadd.s32 %s243, %s244
      %s246 = smul.addr %s245, 8
      %s247 = scalar_lea.vmem %s0, %s246
      %p248 = scmp.lt.s32.totalorder %s20, 1
      %s249 = scalar_select %p248, %s20, 1
      %p250 = scmp.lt.s32.totalorder %s21, 0
      %s251 = scalar_select %p250, %s21, 0
      %s252 = smul.addr %s249, 4
      %s253 = sadd.s32 %s251, %s252
      %s254 = smul.addr %s253, 8
      %s255 = scalar_lea.vmem %s5, %s254
      %v256 = vld [vmem:[%s1] sm:$0xff]
      %v257 = vld [vmem:[%s1 + $0x8] sm:$0xff]
      %v258 = vld [vmem:[%s3] sm:$0xff]
      %v259 = vld [vmem:[%s3 + $0x8] sm:$0xff]
      %v260 = vld [vmem:[%s3 + $0x10] sm:$0xff]
      %v261 = vld [vmem:[%s3 + $0x18] sm:$0xff]
      %v262 = vld [vmem:[%s2] sm:$0xff]
      %v263 = vld [vmem:[%s2 + $0x8] sm:$0xff]
      %v264 = vld [vmem:[%s4] sm:$0xff]
      %v265 = vld [vmem:[%s4 + $0x8] sm:$0xff]
      %v266 = vld [vmem:[%s4 + $0x10] sm:$0xff]
      %v267 = vld [vmem:[%s4 + $0x18] sm:$0xff]
      %v268 = vld [vmem:[%s247] sm:$0x7f]
      %270 = vset.pattern.permute.xlu0 0
      %271 = vperm.xlu0 %270, %v262
      %v272 = vpop.permute.xlu0 %271
      %275 = vset.pattern.permute.xlu0 0
      %276 = vperm.xlu0 %275, %v263
      %v277 = vpop.permute.xlu0 %276
      %vm279 = vcmask 56320
      %v281 = vsel %vm279, %v256, 0
      %v284 = vsel %vm279, %v257, 0
      %vm286 = vcmask 1046528
      %v288 = vsel %vm286, %v268, 0
      %290 = vmatpush.msra.mxu0 0.0
      %291 = vmatpush.msra.mxu0 0.0
      %292 = vmatpush.msra.mxu0 0.0
      %293 = vmatpush.msra.mxu0 0.0
      %294 = vmatpush.msra.mxu0 0.0
      %295 = vmatpush.msra.mxu0 0.0
      %296 = vmatpush.msra.mxu0 0.0
      %297 = vmatpush.msra.mxu0 0.0
      %298 = vmatpush.msra.mxu0 0.0
      %299 = vmatpush.msra.mxu0 0.0
      %300 = vmatpush.msra.mxu0 0.0
      %301 = vmatpush.msra.mxu0 0.0
      %302 = vmatpush.msra.mxu0 0.0
      %303 = vmatpush.msra.mxu0 0.0
      %304 = vmatpush.msra.mxu0 0.0
      %305 = vmatpush.msra.mxu0 %v288
      %306 = vmatmul.f32.gmra.mxu0 %v281
      %v307 = vpop.f32.mrf.mxu0
      %v308 = vadd.f32 %v272, %v307
      %309 = vmatmul.f32.gmra.mxu0 %v284
      %v310 = vpop.f32.mrf.mxu0
      %v311 = vadd.f32 %v277, %v310
      %312 = vdwg.mxu0
      %v313 = vmax.f32 %v308, 0.0
      %v314 = vmax.f32 %v311, 0.0
      %316 = vset.pattern.permute.xlu0 0
      %317 = vperm.xlu0 %316, %v264
      %v318 = vpop.permute.xlu0 %317
      %321 = vset.pattern.permute.xlu0 0
      %322 = vperm.xlu0 %321, %v265
      %v323 = vpop.permute.xlu0 %322
      %326 = vset.pattern.permute.xlu0 0
      %327 = vperm.xlu0 %326, %v266
      %v328 = vpop.permute.xlu0 %327
      %331 = vset.pattern.permute.xlu0 0
      %332 = vperm.xlu0 %331, %v267
      %v333 = vpop.permute.xlu0 %332
      %vm335 = vcmask 130048
      %v337 = vsel %vm335, %v258, 0
      %v340 = vsel %vm335, %v259, 0
      %v343 = vsel %vm335, %v260, 0
      %v346 = vsel %vm335, %v261, 0
      %348 = vmatpush.msra.mxu0 0.0
      %349 = vmatpush.msra.mxu0 0.0
      %350 = vmatpush.msra.mxu0 0.0
      %351 = vmatpush.msra.mxu0 0.0
      %352 = vmatpush.msra.mxu0 0.0
      %353 = vmatpush.msra.mxu0 0.0
      %354 = vmatpush.msra.mxu0 0.0
      %355 = vmatpush.msra.mxu0 0.0
      %356 = vmatpush.msra.mxu0 0.0
      %357 = vmatpush.msra.mxu0 0.0
      %358 = vmatpush.msra.mxu0 0.0
      %359 = vmatpush.msra.mxu0 0.0
      %360 = vmatpush.msra.mxu0 0.0
      %361 = vmatpush.msra.mxu0 0.0
      %362 = vmatpush.msra.mxu0 %v314
      %363 = vmatpush.msra.mxu0 %v313
      %364 = vmatmul.f32.gmra.mxu0 %v337
      %v365 = vpop.f32.mrf.mxu0
      %v366 = vadd.f32 %v318, %v365
      %367 = vmatmul.f32.gmra.mxu0 %v340
      %v368 = vpop.f32.mrf.mxu0
      %v369 = vadd.f32 %v323, %v368
      %370 = vmatmul.f32.gmra.mxu0 %v343
      %v371 = vpop.f32.mrf.mxu0
      %v372 = vadd.f32 %v328, %v371
      %373 = vmatmul.f32.gmra.mxu0 %v346
      %v374 = vpop.f32.mrf.mxu0
      %v375 = vadd.f32 %v333, %v374
      %376 = vdwg.mxu0
      %v377 = vmax.f32 %v366, 0.0
      %v378 = vmax.f32 %v369, 0.0
      %v379 = vmax.f32 %v372, 0.0
      %v380 = vmax.f32 %v375, 0.0
      %s381 = scalar_lea.vmem %s247, 8
      %v382 = vld [vmem:[%s381] sm:$0x7f]
      %v384 = vsel %vm286, %v382, 0
      %386 = vmatpush.msra.mxu0 0.0
      %387 = vmatpush.msra.mxu0 0.0
      %388 = vmatpush.msra.mxu0 0.0
      %389 = vmatpush.msra.mxu0 0.0
      %390 = vmatpush.msra.mxu0 0.0
      %391 = vmatpush.msra.mxu0 0.0
      %392 = vmatpush.msra.mxu0 0.0
      %393 = vmatpush.msra.mxu0 0.0
      %394 = vmatpush.msra.mxu0 0.0
      %395 = vmatpush.msra.mxu0 0.0
      %396 = vmatpush.msra.mxu0 0.0
      %397 = vmatpush.msra.mxu0 0.0
      %398 = vmatpush.msra.mxu0 0.0
      %399 = vmatpush.msra.mxu0 0.0
      %400 = vmatpush.msra.mxu0 0.0
      %401 = vmatpush.msra.mxu0 %v384
      %402 = vmatmul.f32.gmra.mxu0 %v281
      %v403 = vpop.f32.mrf.mxu0
      %v404 = vadd.f32 %v272, %v403
      %405 = vmatmul.f32.gmra.mxu0 %v284
      %v406 = vpop.f32.mrf.mxu0
      %v407 = vadd.f32 %v277, %v406
      %408 = vdwg.mxu0
      %v409 = vmax.f32 %v404, 0.0
      %v410 = vmax.f32 %v407, 0.0
      %411 = vmatpush.msra.mxu0 0.0
      %412 = vmatpush.msra.mxu0 0.0
      %413 = vmatpush.msra.mxu0 0.0
      %414 = vmatpush.msra.mxu0 0.0
      %415 = vmatpush.msra.mxu0 0.0
      %416 = vmatpush.msra.mxu0 0.0
      %417 = vmatpush.msra.mxu0 0.0
      %418 = vmatpush.msra.mxu0 0.0
      %419 = vmatpush.msra.mxu0 0.0
      %420 = vmatpush.msra.mxu0 0.0
      %421 = vmatpush.msra.mxu0 0.0
      %422 = vmatpush.msra.mxu0 0.0
      %423 = vmatpush.msra.mxu0 0.0
      %424 = vmatpush.msra.mxu0 0.0
      %425 = vmatpush.msra.mxu0 %v410
      %426 = vmatpush.msra.mxu0 %v409
      %427 = vmatmul.f32.gmra.mxu0 %v337
      %v428 = vpop.f32.mrf.mxu0
      %v429 = vadd.f32 %v318, %v428
      %430 = vmatmul.f32.gmra.mxu0 %v340
      %v431 = vpop.f32.mrf.mxu0
      %v432 = vadd.f32 %v323, %v431
      %433 = vmatmul.f32.gmra.mxu0 %v343
      %v434 = vpop.f32.mrf.mxu0
      %v435 = vadd.f32 %v328, %v434
      %436 = vmatmul.f32.gmra.mxu0 %v346
      %v437 = vpop.f32.mrf.mxu0
      %v438 = vadd.f32 %v333, %v437
      %439 = vdwg.mxu0
      %v440 = vmax.f32 %v429, 0.0
      %v441 = vmax.f32 %v432, 0.0
      %v442 = vmax.f32 %v435, 0.0
      %v443 = vmax.f32 %v438, 0.0
      %v444 = vmax.f32 %v377, %v440
      %v445 = vmax.f32 %v378, %v441
      %v446 = vmax.f32 %v379, %v442
      %v447 = vmax.f32 %v380, %v443
      %s448 = scalar_lea.vmem %s247, 16
      %v449 = vld [vmem:[%s448] sm:$0x7f]
      %v451 = vsel %vm286, %v449, 0
      %453 = vmatpush.msra.mxu0 0.0
      %454 = vmatpush.msra.mxu0 0.0
      %455 = vmatpush.msra.mxu0 0.0
      %456 = vmatpush.msra.mxu0 0.0
      %457 = vmatpush.msra.mxu0 0.0
      %458 = vmatpush.msra.mxu0 0.0
      %459 = vmatpush.msra.mxu0 0.0
      %460 = vmatpush.msra.mxu0 0.0
      %461 = vmatpush.msra.mxu0 0.0
      %462 = vmatpush.msra.mxu0 0.0
      %463 = vmatpush.msra.mxu0 0.0
      %464 = vmatpush.msra.mxu0 0.0
      %465 = vmatpush.msra.mxu0 0.0
      %466 = vmatpush.msra.mxu0 0.0
      %467 = vmatpush.msra.mxu0 0.0
      %468 = vmatpush.msra.mxu0 %v451
      %469 = vmatmul.f32.gmra.mxu0 %v281
      %v470 = vpop.f32.mrf.mxu0
      %v471 = vadd.f32 %v272, %v470
      %472 = vmatmul.f32.gmra.mxu0 %v284
      %v473 = vpop.f32.mrf.mxu0
      %v474 = vadd.f32 %v277, %v473
      %475 = vdwg.mxu0
      %v476 = vmax.f32 %v471, 0.0
      %v477 = vmax.f32 %v474, 0.0
      %478 = vmatpush.msra.mxu0 0.0
      %479 = vmatpush.msra.mxu0 0.0
      %480 = vmatpush.msra.mxu0 0.0
      %481 = vmatpush.msra.mxu0 0.0
      %482 = vmatpush.msra.mxu0 0.0
      %483 = vmatpush.msra.mxu0 0.0
      %484 = vmatpush.msra.mxu0 0.0
      %485 = vmatpush.msra.mxu0 0.0
      %486 = vmatpush.msra.mxu0 0.0
      %487 = vmatpush.msra.mxu0 0.0
      %488 = vmatpush.msra.mxu0 0.0
      %489 = vmatpush.msra.mxu0 0.0
      %490 = vmatpush.msra.mxu0 0.0
      %491 = vmatpush.msra.mxu0 0.0
      %492 = vmatpush.msra.mxu0 %v477
      %493 = vmatpush.msra.mxu0 %v476
      %494 = vmatmul.f32.gmra.mxu0 %v337
      %v495 = vpop.f32.mrf.mxu0
      %v496 = vadd.f32 %v318, %v495
      %497 = vmatmul.f32.gmra.mxu0 %v340
      %v498 = vpop.f32.mrf.mxu0
      %v499 = vadd.f32 %v323, %v498
      %500 = vmatmul.f32.gmra.mxu0 %v343
      %v501 = vpop.f32.mrf.mxu0
      %v502 = vadd.f32 %v328, %v501
      %503 = vmatmul.f32.gmra.mxu0 %v346
      %v504 = vpop.f32.mrf.mxu0
      %v505 = vadd.f32 %v333, %v504
      %506 = vdwg.mxu0
      %v507 = vmax.f32 %v496, 0.0
      %v508 = vmax.f32 %v499, 0.0
      %v509 = vmax.f32 %v502, 0.0
      %v510 = vmax.f32 %v505, 0.0
      %v511 = vmax.f32 %v444, %v507
      %v512 = vmax.f32 %v445, %v508
      %v513 = vmax.f32 %v446, %v509
      %v514 = vmax.f32 %v447, %v510
      %s515 = scalar_lea.vmem %s247, 24
      %v516 = vld [vmem:[%s515] sm:$0x7f]
      %v518 = vsel %vm286, %v516, 0
      %520 = vmatpush.msra.mxu0 0.0
      %521 = vmatpush.msra.mxu0 0.0
      %522 = vmatpush.msra.mxu0 0.0
      %523 = vmatpush.msra.mxu0 0.0
      %524 = vmatpush.msra.mxu0 0.0
      %525 = vmatpush.msra.mxu0 0.0
      %526 = vmatpush.msra.mxu0 0.0
      %527 = vmatpush.msra.mxu0 0.0
      %528 = vmatpush.msra.mxu0 0.0
      %529 = vmatpush.msra.mxu0 0.0
      %530 = vmatpush.msra.mxu0 0.0
      %531 = vmatpush.msra.mxu0 0.0
      %532 = vmatpush.msra.mxu0 0.0
      %533 = vmatpush.msra.mxu0 0.0
      %534 = vmatpush.msra.mxu0 0.0
      %535 = vmatpush.msra.mxu0 %v518
      %536 = vmatmul.f32.gmra.mxu0 %v281
      %v537 = vpop.f32.mrf.mxu0
      %v538 = vadd.f32 %v272, %v537
      %539 = vmatmul.f32.gmra.mxu0 %v284
      %v540 = vpop.f32.mrf.mxu0
      %v541 = vadd.f32 %v277, %v540
      %542 = vdwg.mxu0
      %v543 = vmax.f32 %v538, 0.0
      %v544 = vmax.f32 %v541, 0.0
      %545 = vmatpush.msra.mxu0 0.0
      %546 = vmatpush.msra.mxu0 0.0
      %547 = vmatpush.msra.mxu0 0.0
      %548 = vmatpush.msra.mxu0 0.0
      %549 = vmatpush.msra.mxu0 0.0
      %550 = vmatpush.msra.mxu0 0.0
      %551 = vmatpush.msra.mxu0 0.0
      %552 = vmatpush.msra.mxu0 0.0
      %553 = vmatpush.msra.mxu0 0.0
      %554 = vmatpush.msra.mxu0 0.0
      %555 = vmatpush.msra.mxu0 0.0
      %556 = vmatpush.msra.mxu0 0.0
      %557 = vmatpush.msra.mxu0 0.0
      %558 = vmatpush.msra.mxu0 0.0
      %559 = vmatpush.msra.mxu0 %v544
      %560 = vmatpush.msra.mxu0 %v543
      %561 = vmatmul.f32.gmra.mxu0 %v337
      %v562 = vpop.f32.mrf.mxu0
      %v563 = vadd.f32 %v318, %v562
      %564 = vmatmul.f32.gmra.mxu0 %v340
      %v565 = vpop.f32.mrf.mxu0
      %v566 = vadd.f32 %v323, %v565
      %567 = vmatmul.f32.gmra.mxu0 %v343
      %v568 = vpop.f32.mrf.mxu0
      %v569 = vadd.f32 %v328, %v568
      %570 = vmatmul.f32.gmra.mxu0 %v346
      %v571 = vpop.f32.mrf.mxu0
      %v572 = vadd.f32 %v333, %v571
      %573 = vdwg.mxu0
      %v574 = vmax.f32 %v563, 0.0
      %v575 = vmax.f32 %v566, 0.0
      %v576 = vmax.f32 %v569, 0.0
      %v577 = vmax.f32 %v572, 0.0
      %v578 = vmax.f32 %v511, %v574
      %v579 = vmax.f32 %v512, %v575
      %v580 = vmax.f32 %v513, %v576
      %v581 = vmax.f32 %v514, %v577
      %s582 = scalar_lea.vmem %s247, 32
      %v583 = vld [vmem:[%s582] sm:$0x7f]
      %v585 = vsel %vm286, %v583, 0
      %587 = vmatpush.msra.mxu0 0.0
      %588 = vmatpush.msra.mxu0 0.0
      %589 = vmatpush.msra.mxu0 0.0
      %590 = vmatpush.msra.mxu0 0.0
      %591 = vmatpush.msra.mxu0 0.0
      %592 = vmatpush.msra.mxu0 0.0
      %593 = vmatpush.msra.mxu0 0.0
      %594 = vmatpush.msra.mxu0 0.0
      %595 = vmatpush.msra.mxu0 0.0
      %596 = vmatpush.msra.mxu0 0.0
      %597 = vmatpush.msra.mxu0 0.0
      %598 = vmatpush.msra.mxu0 0.0
      %599 = vmatpush.msra.mxu0 0.0
      %600 = vmatpush.msra.mxu0 0.0
      %601 = vmatpush.msra.mxu0 0.0
      %602 = vmatpush.msra.mxu0 %v585
      %603 = vmatmul.f32.gmra.mxu0 %v281
      %v604 = vpop.f32.mrf.mxu0
      %v605 = vadd.f32 %v272, %v604
      %606 = vmatmul.f32.gmra.mxu0 %v284
      %v607 = vpop.f32.mrf.mxu0
      %v608 = vadd.f32 %v277, %v607
      %609 = vdwg.mxu0
      %v610 = vmax.f32 %v605, 0.0
      %v611 = vmax.f32 %v608, 0.0
      %612 = vmatpush.msra.mxu0 0.0
      %613 = vmatpush.msra.mxu0 0.0
      %614 = vmatpush.msra.mxu0 0.0
      %615 = vmatpush.msra.mxu0 0.0
      %616 = vmatpush.msra.mxu0 0.0
      %617 = vmatpush.msra.mxu0 0.0
      %618 = vmatpush.msra.mxu0 0.0
      %619 = vmatpush.msra.mxu0 0.0
      %620 = vmatpush.msra.mxu0 0.0
      %621 = vmatpush.msra.mxu0 0.0
      %622 = vmatpush.msra.mxu0 0.0
      %623 = vmatpush.msra.mxu0 0.0
      %624 = vmatpush.msra.mxu0 0.0
      %625 = vmatpush.msra.mxu0 0.0
      %626 = vmatpush.msra.mxu0 %v611
      %627 = vmatpush.msra.mxu0 %v610
      %628 = vmatmul.f32.gmra.mxu0 %v337
      %v629 = vpop.f32.mrf.mxu0
      %v630 = vadd.f32 %v318, %v629
      %631 = vmatmul.f32.gmra.mxu0 %v340
      %v632 = vpop.f32.mrf.mxu0
      %v633 = vadd.f32 %v323, %v632
      %634 = vmatmul.f32.gmra.mxu0 %v343
      %v635 = vpop.f32.mrf.mxu0
      %v636 = vadd.f32 %v328, %v635
      %637 = vmatmul.f32.gmra.mxu0 %v346
      %v638 = vpop.f32.mrf.mxu0
      %v639 = vadd.f32 %v333, %v638
      %640 = vdwg.mxu0
      %v641 = vmax.f32 %v630, 0.0
      %v642 = vmax.f32 %v633, 0.0
      %v643 = vmax.f32 %v636, 0.0
      %v644 = vmax.f32 %v639, 0.0
      %v645 = vmax.f32 %v578, %v641
      %v646 = vmax.f32 %v579, %v642
      %v647 = vmax.f32 %v580, %v643
      %v648 = vmax.f32 %v581, %v644
      %s649 = scalar_lea.vmem %s247, 40
      %v650 = vld [vmem:[%s649] sm:$0x7f]
      %v652 = vsel %vm286, %v650, 0
      %654 = vmatpush.msra.mxu0 0.0
      %655 = vmatpush.msra.mxu0 0.0
      %656 = vmatpush.msra.mxu0 0.0
      %657 = vmatpush.msra.mxu0 0.0
      %658 = vmatpush.msra.mxu0 0.0
      %659 = vmatpush.msra.mxu0 0.0
      %660 = vmatpush.msra.mxu0 0.0
      %661 = vmatpush.msra.mxu0 0.0
      %662 = vmatpush.msra.mxu0 0.0
      %663 = vmatpush.msra.mxu0 0.0
      %664 = vmatpush.msra.mxu0 0.0
      %665 = vmatpush.msra.mxu0 0.0
      %666 = vmatpush.msra.mxu0 0.0
      %667 = vmatpush.msra.mxu0 0.0
      %668 = vmatpush.msra.mxu0 0.0
      %669 = vmatpush.msra.mxu0 %v652
      %670 = vmatmul.f32.gmra.mxu0 %v281
      %v671 = vpop.f32.mrf.mxu0
      %v672 = vadd.f32 %v272, %v671
      %673 = vmatmul.f32.gmra.mxu0 %v284
      %v674 = vpop.f32.mrf.mxu0
      %v675 = vadd.f32 %v277, %v674
      %676 = vdwg.mxu0
      %v677 = vmax.f32 %v672, 0.0
      %v678 = vmax.f32 %v675, 0.0
      %679 = vmatpush.msra.mxu0 0.0
      %680 = vmatpush.msra.mxu0 0.0
      %681 = vmatpush.msra.mxu0 0.0
      %682 = vmatpush.msra.mxu0 0.0
      %683 = vmatpush.msra.mxu0 0.0
      %684 = vmatpush.msra.mxu0 0.0
      %685 = vmatpush.msra.mxu0 0.0
      %686 = vmatpush.msra.mxu0 0.0
      %687 = vmatpush.msra.mxu0 0.0
      %688 = vmatpush.msra.mxu0 0.0
      %689 = vmatpush.msra.mxu0 0.0
      %690 = vmatpush.msra.mxu0 0.0
      %691 = vmatpush.msra.mxu0 0.0
      %692 = vmatpush.msra.mxu0 0.0
      %693 = vmatpush.msra.mxu0 %v678
      %694 = vmatpush.msra.mxu0 %v677
      %695 = vmatmul.f32.gmra.mxu0 %v337
      %v696 = vpop.f32.mrf.mxu0
      %v697 = vadd.f32 %v318, %v696
      %698 = vmatmul.f32.gmra.mxu0 %v340
      %v699 = vpop.f32.mrf.mxu0
      %v700 = vadd.f32 %v323, %v699
      %701 = vmatmul.f32.gmra.mxu0 %v343
      %v702 = vpop.f32.mrf.mxu0
      %v703 = vadd.f32 %v328, %v702
      %704 = vmatmul.f32.gmra.mxu0 %v346
      %v705 = vpop.f32.mrf.mxu0
      %v706 = vadd.f32 %v333, %v705
      %707 = vdwg.mxu0
      %v708 = vmax.f32 %v697, 0.0
      %v709 = vmax.f32 %v700, 0.0
      %v710 = vmax.f32 %v703, 0.0
      %v711 = vmax.f32 %v706, 0.0
      %v712 = vmax.f32 %v645, %v708
      %v713 = vmax.f32 %v646, %v709
      %v714 = vmax.f32 %v647, %v710
      %v715 = vmax.f32 %v648, %v711
      %s716 = scalar_lea.vmem %s247, 48
      %v717 = vld [vmem:[%s716] sm:$0x7f]
      %v719 = vsel %vm286, %v717, 0
      %721 = vmatpush.msra.mxu0 0.0
      %722 = vmatpush.msra.mxu0 0.0
      %723 = vmatpush.msra.mxu0 0.0
      %724 = vmatpush.msra.mxu0 0.0
      %725 = vmatpush.msra.mxu0 0.0
      %726 = vmatpush.msra.mxu0 0.0
      %727 = vmatpush.msra.mxu0 0.0
      %728 = vmatpush.msra.mxu0 0.0
      %729 = vmatpush.msra.mxu0 0.0
      %730 = vmatpush.msra.mxu0 0.0
      %731 = vmatpush.msra.mxu0 0.0
      %732 = vmatpush.msra.mxu0 0.0
      %733 = vmatpush.msra.mxu0 0.0
      %734 = vmatpush.msra.mxu0 0.0
      %735 = vmatpush.msra.mxu0 0.0
      %736 = vmatpush.msra.mxu0 %v719
      %737 = vmatmul.f32.gmra.mxu0 %v281
      %v738 = vpop.f32.mrf.mxu0
      %v739 = vadd.f32 %v272, %v738
      %740 = vmatmul.f32.gmra.mxu0 %v284
      %v741 = vpop.f32.mrf.mxu0
      %v742 = vadd.f32 %v277, %v741
      %743 = vdwg.mxu0
      %v744 = vmax.f32 %v739, 0.0
      %v745 = vmax.f32 %v742, 0.0
      %746 = vmatpush.msra.mxu0 0.0
      %747 = vmatpush.msra.mxu0 0.0
      %748 = vmatpush.msra.mxu0 0.0
      %749 = vmatpush.msra.mxu0 0.0
      %750 = vmatpush.msra.mxu0 0.0
      %751 = vmatpush.msra.mxu0 0.0
      %752 = vmatpush.msra.mxu0 0.0
      %753 = vmatpush.msra.mxu0 0.0
      %754 = vmatpush.msra.mxu0 0.0
      %755 = vmatpush.msra.mxu0 0.0
      %756 = vmatpush.msra.mxu0 0.0
      %757 = vmatpush.msra.mxu0 0.0
      %758 = vmatpush.msra.mxu0 0.0
      %759 = vmatpush.msra.mxu0 0.0
      %760 = vmatpush.msra.mxu0 %v745
      %761 = vmatpush.msra.mxu0 %v744
      %762 = vmatmul.f32.gmra.mxu0 %v337
      %v763 = vpop.f32.mrf.mxu0
      %v764 = vadd.f32 %v318, %v763
      %765 = vmatmul.f32.gmra.mxu0 %v340
      %v766 = vpop.f32.mrf.mxu0
      %v767 = vadd.f32 %v323, %v766
      %768 = vmatmul.f32.gmra.mxu0 %v343
      %v769 = vpop.f32.mrf.mxu0
      %v770 = vadd.f32 %v328, %v769
      %771 = vmatmul.f32.gmra.mxu0 %v346
      %v772 = vpop.f32.mrf.mxu0
      %v773 = vadd.f32 %v333, %v772
      %774 = vdwg.mxu0
      %v775 = vmax.f32 %v764, 0.0
      %v776 = vmax.f32 %v767, 0.0
      %v777 = vmax.f32 %v770, 0.0
      %v778 = vmax.f32 %v773, 0.0
      %v779 = vmax.f32 %v712, %v775
      %v780 = vmax.f32 %v713, %v776
      %v781 = vmax.f32 %v714, %v777
      %v782 = vmax.f32 %v715, %v778
      %s783 = scalar_lea.vmem %s247, 56
      %v784 = vld [vmem:[%s783] sm:$0x7f]
      %v786 = vsel %vm286, %v784, 0
      %788 = vmatpush.msra.mxu0 0.0
      %789 = vmatpush.msra.mxu0 0.0
      %790 = vmatpush.msra.mxu0 0.0
      %791 = vmatpush.msra.mxu0 0.0
      %792 = vmatpush.msra.mxu0 0.0
      %793 = vmatpush.msra.mxu0 0.0
      %794 = vmatpush.msra.mxu0 0.0
      %795 = vmatpush.msra.mxu0 0.0
      %796 = vmatpush.msra.mxu0 0.0
      %797 = vmatpush.msra.mxu0 0.0
      %798 = vmatpush.msra.mxu0 0.0
      %799 = vmatpush.msra.mxu0 0.0
      %800 = vmatpush.msra.mxu0 0.0
      %801 = vmatpush.msra.mxu0 0.0
      %802 = vmatpush.msra.mxu0 0.0
      %803 = vmatpush.msra.mxu0 %v786
      %804 = vmatmul.f32.gmra.mxu0 %v281
      %v805 = vpop.f32.mrf.mxu0
      %v806 = vadd.f32 %v272, %v805
      %807 = vmatmul.f32.gmra.mxu0 %v284
      %v808 = vpop.f32.mrf.mxu0
      %v809 = vadd.f32 %v277, %v808
      %810 = vdwg.mxu0
      %v811 = vmax.f32 %v806, 0.0
      %v812 = vmax.f32 %v809, 0.0
      %813 = vmatpush.msra.mxu0 0.0
      %814 = vmatpush.msra.mxu0 0.0
      %815 = vmatpush.msra.mxu0 0.0
      %816 = vmatpush.msra.mxu0 0.0
      %817 = vmatpush.msra.mxu0 0.0
      %818 = vmatpush.msra.mxu0 0.0
      %819 = vmatpush.msra.mxu0 0.0
      %820 = vmatpush.msra.mxu0 0.0
      %821 = vmatpush.msra.mxu0 0.0
      %822 = vmatpush.msra.mxu0 0.0
      %823 = vmatpush.msra.mxu0 0.0
      %824 = vmatpush.msra.mxu0 0.0
      %825 = vmatpush.msra.mxu0 0.0
      %826 = vmatpush.msra.mxu0 0.0
      %827 = vmatpush.msra.mxu0 %v812
      %828 = vmatpush.msra.mxu0 %v811
      %829 = vmatmul.f32.gmra.mxu0 %v337
      %v830 = vpop.f32.mrf.mxu0
      %v831 = vadd.f32 %v318, %v830
      %832 = vmatmul.f32.gmra.mxu0 %v340
      %v833 = vpop.f32.mrf.mxu0
      %v834 = vadd.f32 %v323, %v833
      %835 = vmatmul.f32.gmra.mxu0 %v343
      %v836 = vpop.f32.mrf.mxu0
      %v837 = vadd.f32 %v328, %v836
      %838 = vmatmul.f32.gmra.mxu0 %v346
      %v839 = vpop.f32.mrf.mxu0
      %v840 = vadd.f32 %v333, %v839
      %841 = vdwg.mxu0
      %v842 = vmax.f32 %v831, 0.0
      %v843 = vmax.f32 %v834, 0.0
      %v844 = vmax.f32 %v837, 0.0
      %v845 = vmax.f32 %v840, 0.0
      %v846 = vmax.f32 %v779, %v842
      %v847 = vmax.f32 %v780, %v843
      %v848 = vmax.f32 %v781, %v844
      %v849 = vmax.f32 %v782, %v845
      %vm850 = vcmask 64512
      %851 = vst.msk [vmem:[%s255] sm:$0xff] %vm850, %v846
      %852 = vst.msk [vmem:[%s255 + $0x8] sm:$0xff] %vm850, %v847
      %853 = vst.msk [vmem:[%s255 + $0x10] sm:$0xff] %vm850, %v848
      %854 = vst.msk [vmem:[%s255 + $0x18] sm:$0xff] %vm850, %v849
      %p855 = scmp.lt.s32.totalorder %s20, 1
      %s856 = scalar_select %p855, %s20, 1
      %p857 = scmp.lt.s32.totalorder %s21, 0
      %s858 = scalar_select %p857, %s21, 0
      %s859 = smul.addr %s856, 4
      %s860 = sadd.s32 %s858, %s859
      %s861 = smul.addr %s860, 8
      %s862 = scalar_lea.vmem %s5, %s861
      // Predicated region
      $region41: #{tpu_custom_call.1} parent=39 // pred_check
        %p863 = pneg %p160
      $region42: #{tpu_custom_call.1} parent=39 // pred_check_branch
        %865 = sbr.rel (%p863) target = $region44
      $region43: #{tpu_custom_call.1} parent=39 // pred_region
        _
      $region44: #{tpu_custom_call.1} parent=39 // pred_fallthru
        _
    $region40: #{tpu_custom_call.1} parent=5 // pred_fallthru
      _
    %p866 = scmp.le.s32.totalorder 2, %s11
    // Predicated region
    $region45: #{tpu_custom_call.1} parent=5 // pred_check
      %p867 = pneg %p866
    $region46: #{tpu_custom_call.1} parent=5 // pred_check_branch
      %869 = sbr.rel (%p867) target = $region48
    $region47: #{tpu_custom_call.1} parent=5 // pred_region
      %s870 = ssub.s32 %s11, 2
      // Predicated region
      $region49: #{tpu_custom_call.1} parent=47 // pred_check
        %p871 = pneg %p166
      $region50: #{tpu_custom_call.1} parent=47 // pred_check_branch
        %873 = sbr.rel (%p871) target = $region52
      $region51: #{tpu_custom_call.1} parent=47 // pred_region
        %p874 = scmp.lt.s32.totalorder %s22, 1
        %s875 = scalar_select %p874, %s22, 1
        %p876 = scmp.lt.s32.totalorder %s23, 0
        %s877 = scalar_select %p876, %s23, 0
        %s878 = smul.addr %s875, 4
        %s879 = sadd.s32 %s877, %s878
        %s880 = smul.addr %s879, 8
        %s881 = scalar_lea.vmem %s5, %s880
      $region52: #{tpu_custom_call.1} parent=47 // pred_fallthru
        _
    $region48: #{tpu_custom_call.1} parent=5 // pred_fallthru
      _
  $region6: #{tpu_custom_call.1} parent=0 // loop_footer
    %s15 = sadd.s32 1, %s11
  $region7: #{tpu_custom_call.1} parent=0 // loop_footer_branch
    %10 = sbr.rel target = $region3
  $region8: #{tpu_custom_call.1} parent=0 // loop_exit
    _

</llo_original>
